<compile_context>
chip_gen: v5e
topology: v5e:2x2
jax: 0.10.0
libtpu: 0.0.40
codegen_flags: <defaults>
</compile_context>

<pallas_src>
import functools
import math

import jax
import jax.numpy as jnp
from jax.experimental import pallas as pl
from jax.experimental.pallas import tpu as pltpu


# --------------------------------------------------------------------------
# helpers
# --------------------------------------------------------------------------
def _vmem_limit_bytes():
    """Chip-aware scoped-VMEM limit: big tiles on v5e/v6e, headroom on v7x."""
    try:
        phys = pltpu.get_tpu_info().vmem_capacity_bytes
    except Exception:  # pragma: no cover - conservative fallback
        phys = 64 * 1024 * 1024
    return int(max(32 * 1024 * 1024,
                   min(phys - 16 * 1024 * 1024, 100 * 1024 * 1024)))


def _pick_dst_tile(n, cap=256):
    """dst-row tile: <=cap, divides n, multiple of 8; split for 2 TCs (v7x)."""
    if n <= cap:
        half = n // 2
        if n % 2 == 0 and half % 8 == 0 and half >= 128:
            return half          # lets v7x's two TensorCores share dst rows
        return n
    t = cap - cap % 8
    while t >= 8:
        if n % t == 0:
            return t
        t -= 8
    return n


def _pick_src_tile(n, cap=512):
    """src-column tile: <=cap, divides n, multiple of 128 (lane-aligned)."""
    if n <= cap:
        return n
    t = cap - cap % 128
    while t >= 128:
        if n % t == 0:
            return t
        t -= 128
    return n                      # fall back to a single src tile


def _pick_proj_tile(n, cap=512):
    if n <= cap:
        return n
    t = cap - cap % 8
    while t >= 8:
        if n % t == 0:
            return t
        t -= 8
    return n


# --------------------------------------------------------------------------
# Stage 1: fused node projection (q / k / v / skip), once over all nodes
# --------------------------------------------------------------------------
def _projection_kernel(x_ref, w_ref, b_ref, q_ref, k_ref, v_ref, skip_ref, *,
                       hc, heads, c, apply_leaky, negative_slope):
    xv = x_ref[...].astype(jnp.float32)
    if apply_leaky:                       # F.leaky_relu fused into conv2 input
        xv = jnp.where(xv >= 0.0, xv, jnp.float32(negative_slope) * xv)
    h4 = jnp.dot(xv.astype(jnp.bfloat16), w_ref[...].astype(jnp.bfloat16),
                 preferred_element_type=jnp.float32) + b_ref[...]
    # column layout of the fused weight: [k | v | q | skip]
    for h in range(heads):                # head split paid once, off hot path
        k_ref[h] = h4[:, 0 * hc + h * c:0 * hc + (h + 1) * c].astype(k_ref.dtype)
        v_ref[h] = h4[:, 1 * hc + h * c:1 * hc + (h + 1) * c].astype(v_ref.dtype)
        q_ref[h] = h4[:, 2 * hc + h * c:2 * hc + (h + 1) * c].astype(q_ref.dtype)
    skip_ref[...] = h4[:, 3 * hc:4 * hc].astype(skip_ref.dtype)


def _project(x, params, *, heads, out_channels, apply_leaky):
    N, Fin = x.shape
    H, C = heads, out_channels
    HC = H * C
    w = jnp.concatenate([params["wk"], params["wv"], params["wq"], params["ws"]],
                        axis=1)
    b = jnp.concatenate([params["bk"], params["bv"], params["bq"], params["bs"]],
                        axis=1)
    TMp = _pick_proj_tile(N)
    assert N % TMp == 0

    kernel = functools.partial(_projection_kernel, hc=HC, heads=H, c=C,
                               apply_leaky=apply_leaky, negative_slope=0.01)
    out_shapes = (
        jax.ShapeDtypeStruct((H, N, C), jnp.float32),    # q  (kept f32 for qe)
        jax.ShapeDtypeStruct((H, N, C), jnp.bfloat16),   # k
        jax.ShapeDtypeStruct((H, N, C), jnp.bfloat16),   # v
        jax.ShapeDtypeStruct((N, HC), jnp.float32),      # skip (lin_skip out)
    )
    return pl.pallas_call(
        kernel,
        out_shape=out_shapes,
        grid_spec=pltpu.PrefetchScalarGridSpec(
            num_scalar_prefetch=0,
            grid=(N // TMp,),
            in_specs=[
                pl.BlockSpec((TMp, Fin), lambda r: (r, 0)),
                pl.BlockSpec((Fin, 4 * HC), lambda r: (0, 0)),
                pl.BlockSpec((1, 4 * HC), lambda r: (0, 0)),
            ],
            out_specs=[
                pl.BlockSpec((H, TMp, C), lambda r: (0, r, 0)),
                pl.BlockSpec((H, TMp, C), lambda r: (0, r, 0)),
                pl.BlockSpec((H, TMp, C), lambda r: (0, r, 0)),
                pl.BlockSpec((TMp, HC), lambda r: (r, 0)),
            ],
        ),
        compiler_params=pltpu.CompilerParams(
            dimension_semantics=("parallel",),
            vmem_limit_bytes=_vmem_limit_bytes()),
    )(x, w, b)


# --------------------------------------------------------------------------
# Stage 2: attention with flash-style (dst-tile, src-tile) grid
# --------------------------------------------------------------------------
def _attention_kernel(q_ref, skip_ref, k_ref, v_ref, adj_ref, ea_ref, we_ref,
                      out_ref, m_sc, l_sc, acc_sc, *, heads, out_channels):
    H, C = heads, out_channels
    De = ea_ref.shape[0]
    j = pl.program_id(1)

    @pl.when(j == 0)
    def _():
        m_sc[...] = jnp.full_like(m_sc, -1e30)
        l_sc[...] = jnp.zeros_like(l_sc)
        acc_sc[...] = jnp.zeros_like(acc_sc)

    q = q_ref[...]                                        # (H, TM, C) f32
    k = k_ref[...]                                        # (H, TN, C) bf16
    v = v_ref[...]                                        # (H, TN, C) bf16
    we = we_ref[...].astype(jnp.float32)                  # (H, De, C)
    mask = adj_ref[...].astype(jnp.float32)               # (TM, TN) in {0,1}
    ea = ea_ref[...].astype(jnp.float32)                  # (De, TM, TN)

    # node-key score term on the MXU (bf16 operands, f32 accumulation)
    s = jnp.einsum("hic,hjc->hij", q.astype(jnp.bfloat16), k,
                   preferred_element_type=jnp.float32)    # (H, TM, TN)

    # edge score term: <q_i, We e_ij> = sum_d ea[d,i,j] * qe[h,i,d]
    # (qe computed once per tile; no (TM,TN,C) edge tensor, no per-d reduce)
    qe = jnp.einsum("hic,hdc->hid", q, we,
                    preferred_element_type=jnp.float32)   # (H, TM, De)
    for d in range(De):
        s = s + ea[d][None, :, :] * qe[:, :, d][:, :, None]
    s = s * jnp.float32(1.0 / math.sqrt(C))

    # online masked softmax over source tiles
    s_m = s + (mask[None, :, :] - 1.0) * jnp.float32(1e30)   # masked -> -huge
    m_prev = m_sc[...]
    m_new = jnp.maximum(m_prev, jnp.max(s_m, axis=-1, keepdims=True))
    scale = jnp.exp(m_prev - m_new)
    p = jnp.exp(s_m - m_new) * mask[None, :, :]              # exact zeros, <=1
    l_sc[...] = scale * l_sc[...] + jnp.sum(p, axis=-1, keepdims=True)
    m_sc[...] = m_new

    # aggregation: node values on MXU + edge part via alpha*ea lane reduce
    o = jnp.einsum("hij,hjc->hic", p.astype(jnp.bfloat16), v,
                   preferred_element_type=jnp.float32)       # (H, TM, C)
    for d in range(De):
        pe_d = jnp.sum(p * ea[d][None, :, :], axis=-1)       # (H, TM)
        o = o + pe_d[:, :, None] * we[:, d, :][:, None, :]
    acc_sc[...] = scale * acc_sc[...] + o

    @pl.when(j == pl.num_programs(1) - 1)
    def _():
        inv_l = pl.reciprocal(l_sc[...] + jnp.float32(1e-16), approx=True)
        o_fin = acc_sc[...] * inv_l                          # (H, TM, C)
        if H == 1:
            heads_cat = o_fin[0]
        else:  # once per dst tile only (not on the O(N^2) path)
            heads_cat = jnp.concatenate([o_fin[h] for h in range(H)], axis=-1)
        out_ref[...] = (heads_cat + skip_ref[...]).astype(out_ref.dtype)


def transformer_conv(x, adj, ea, params, *, heads, out_channels,
                     apply_leaky=False):
    """One PyG-style TransformerConv layer (concat=True, edge_dim given)."""
    N = x.shape[0]
    De = ea.shape[0]
    H, C = heads, out_channels
    HC = H * C

    # Stage 1: q/k/v/skip projections, once over all nodes (not per dst tile).
    q_all, k_all, v_all, skip_all = _project(
        x, params, heads=H, out_channels=C, apply_leaky=apply_leaky)

    # lin_edge weight in head-major layout (done once in plain JAX glue)
    we_h = params["we"].reshape(De, H, C).transpose(1, 0, 2)   # (H, De, C)

    TM = _pick_dst_tile(N)
    TN = _pick_src_tile(N)
    assert N % TM == 0 and N % TN == 0
    grid = (N // TM, N // TN)

    kernel = functools.partial(_attention_kernel, heads=H, out_channels=C)

    flops = (4 * H * N * N * C                    # score + aggregation matmuls
             + (3 * De + 12) * H * N * N          # edge terms + softmax VALU
             + 2 * H * N * De * C)                # qe
    cost = pl.CostEstimate(
        flops=int(flops),
        transcendentals=int(H * N * N + 2 * H * N * grid[1]),
        bytes_accessed=int(2 * De * N * N + 2 * N * N            # ea + adj
                           + grid[0] * N * HC * 2 * 2            # k+v re-reads
                           + N * HC * 4 * 2 + N * HC * 4))       # q/skip + out

    return pl.pallas_call(
        kernel,
        out_shape=jax.ShapeDtypeStruct((N, HC), jnp.float32),
        grid_spec=pltpu.PrefetchScalarGridSpec(
            num_scalar_prefetch=0,
            grid=grid,
            in_specs=[
                pl.BlockSpec((H, TM, C), lambda i, j: (0, i, 0)),    # q  (dst)
                pl.BlockSpec((TM, HC), lambda i, j: (i, 0)),         # skip
                pl.BlockSpec((H, TN, C), lambda i, j: (0, j, 0)),    # k  (src)
                pl.BlockSpec((H, TN, C), lambda i, j: (0, j, 0)),    # v  (src)
                pl.BlockSpec((TM, TN), lambda i, j: (i, j)),         # adj
                pl.BlockSpec((De, TM, TN), lambda i, j: (0, i, j)),  # edge attrs
                pl.BlockSpec((H, De, C), lambda i, j: (0, 0, 0)),    # We
            ],
            out_specs=pl.BlockSpec((TM, HC), lambda i, j: (i, 0)),
            scratch_shapes=[
                pltpu.VMEM((H, TM, 1), jnp.float32),   # running max m
                pltpu.VMEM((H, TM, 1), jnp.float32),   # running denom l
                pltpu.VMEM((H, TM, C), jnp.float32),   # running output acc
            ],
        ),
        compiler_params=pltpu.CompilerParams(
            dimension_semantics=("parallel", "arbitrary"),
            vmem_limit_bytes=_vmem_limit_bytes()),
        cost_estimate=cost,
    )(q_all, skip_all, k_all, v_all, adj, ea, we_h)


# --------------------------------------------------------------------------
# parameters / glue / full forward
# --------------------------------------------------------------------------
def init_conv_params(key, in_dim, out_channels, heads, edge_dim):
    """Deterministic synthetic init for one TransformerConv layer's weights."""
    hc = heads * out_channels
    ks = jax.random.split(key, 6)
    s = 0.1
    return {
        "wq": s * jax.random.normal(ks[0], (in_dim, hc), jnp.float32),
        "bq": jnp.zeros((1, hc), jnp.float32),
        "wk": s * jax.random.normal(ks[1], (in_dim, hc), jnp.float32),
        "bk": jnp.zeros((1, hc), jnp.float32),
        "wv": s * jax.random.normal(ks[2], (in_dim, hc), jnp.float32),
        "bv": jnp.zeros((1, hc), jnp.float32),
        "we": s * jax.random.normal(ks[3], (edge_dim, hc), jnp.float32),
        "ws": s * jax.random.normal(ks[4], (in_dim, hc), jnp.float32),
        "bs": 0.01 * jax.random.normal(ks[5], (1, hc), jnp.float32),
    }


def densify_graph(edge_index, edge_attr, num_nodes):
    """Sparse (edge_index, edge_attr) -> adj[dst,src] bf16, ea[d,dst,src] bf16."""
    src, dst = edge_index[0], edge_index[1]
    adj = jnp.zeros((num_nodes, num_nodes), jnp.bfloat16).at[dst, src].set(1.0)
    ea = jnp.zeros((edge_attr.shape[1], num_nodes, num_nodes), jnp.bfloat16)
    ea = ea.at[:, dst, src].set(edge_attr.T.astype(jnp.bfloat16))
    return adj, ea


def transform_forward(x, edge_index, edge_attr, params1, params2,
                      *, embedding_size, heads):
    N = x.shape[0]
    adj, ea = densify_graph(edge_index, edge_attr, N)
    # conv1 (heads=heads, concat) -> leaky_relu (fused into conv2's projection)
    # -> conv2 (heads=1)
    h = transformer_conv(x, adj, ea, params1,
                         heads=heads, out_channels=embedding_size,
                         apply_leaky=False)
    h = transformer_conv(h, adj, ea, params2,
                         heads=1, out_channels=embedding_size,
                         apply_leaky=True)
    return h


if __name__ == "__main__":
    num_node_features = 4
    embedding_size = 32
    heads = 2
    edge_dim = 3
    N = 8  # nodes

    key = jax.random.PRNGKey(0)
    kx, ke, k1, k2 = jax.random.split(key, 4)

    # node features
    x = jax.random.normal(kx, (N, num_node_features), jnp.float32)

    # deterministic simple graph: each node i sends edges to (i+1)%N and (i+3)%N
    src = jnp.concatenate([jnp.arange(N), jnp.arange(N)])
    dst = jnp.concatenate([(jnp.arange(N) + 1) % N, (jnp.arange(N) + 3) % N])
    edge_index = jnp.stack([src, dst]).astype(jnp.int32)          # (2, 16)
    edge_attr = jax.random.normal(ke, (edge_index.shape[1], edge_dim), jnp.float32)

    # parameters (conv2's lazy in_channels resolves to heads * embedding_size)
    params1 = init_conv_params(k1, num_node_features, embedding_size, heads, edge_dim)
    params2 = init_conv_params(k2, heads * embedding_size, embedding_size, 1, edge_dim)

    out = transform_forward(x, edge_index, edge_attr, params1, params2,
                            embedding_size=embedding_size, heads=heads)
    out = jax.block_until_ready(out)
    assert out.shape == (N, embedding_size), out.shape
    assert bool(jnp.all(jnp.isfinite(out)))
    print("KERNEL_OK")
</pallas_src>

<mosaic_0001>
module attributes {stable_mosaic.version = 11 : i64} {
  func.func @_projection_kernel(%arg0: i32, %arg1: memref<8x4xf32, #tpu.memory_space<vmem>>, %arg2: memref<4x256xf32, #tpu.memory_space<vmem>>, %arg3: memref<1x256xf32, #tpu.memory_space<vmem>>, %arg4: memref<2x8x32xf32, #tpu.memory_space<vmem>>, %arg5: memref<2x8x32xbf16, #tpu.memory_space<vmem>>, %arg6: memref<2x8x32xbf16, #tpu.memory_space<vmem>>, %arg7: memref<8x64xf32, #tpu.memory_space<vmem>>) attributes {dimension_semantics = [#tpu.dimension_semantics<parallel>], iteration_bounds = array<i64: 1>, scalar_prefetch = 0 : i64, scratch_operands = 0 : i64, tpu.core_type = #tpu.core_type<tc>, window_params = [{transform_indices = @transform_0, window_bounds = array<i64: 8, 4>}, {pipeline_mode = #tpu.pipeline_mode<synchronous>, transform_indices = @transform_1, window_bounds = array<i64: 4, 256>}, {pipeline_mode = #tpu.pipeline_mode<synchronous>, transform_indices = @transform_2, window_bounds = array<i64: 1, 256>}, {transform_indices = @transform_3, window_bounds = array<i64: 2, 8, 32>}, {transform_indices = @transform_4, window_bounds = array<i64: 2, 8, 32>}, {transform_indices = @transform_5, window_bounds = array<i64: 2, 8, 32>}, {transform_indices = @transform_6, window_bounds = array<i64: 8, 64>}]} {
    %c0 = arith.constant 0 : index
    %c0_0 = arith.constant 0 : index
    %0 = vector.load %arg1[%c0, %c0_0] : memref<8x4xf32, #tpu.memory_space<vmem>>, vector<8x4xf32>
    %1 = arith.truncf %0 : vector<8x4xf32> to vector<8x4xbf16>
    %c0_1 = arith.constant 0 : index
    %c0_2 = arith.constant 0 : index
    %2 = vector.load %arg2[%c0_1, %c0_2] : memref<4x256xf32, #tpu.memory_space<vmem>>, vector<4x256xf32>
    %3 = arith.truncf %2 : vector<4x256xf32> to vector<4x256xbf16>
    %cst = arith.constant dense<0.000000e+00> : vector<8x256xf32>
    %4 = tpu.matmul %1, %3, %cst {dimension_numbers = #tpu.dot_dimension_numbers<[1], [0], [0], [1], [0, 0, 1, 1], [], []>} : vector<8x4xbf16>, vector<4x256xbf16>, vector<8x256xf32> -> vector<8x256xf32>
    %c0_3 = arith.constant 0 : index
    %c0_4 = arith.constant 0 : index
    %5 = vector.load %arg3[%c0_3, %c0_4] : memref<1x256xf32, #tpu.memory_space<vmem>>, vector<1x256xf32>
    %6 = vector.broadcast %5 : vector<1x256xf32> to vector<8x256xf32>
    %7 = arith.addf %4, %6 : vector<8x256xf32>
    %8 = vector.extract_strided_slice %7 {offsets = [0, 0], sizes = [8, 32], strides = [1, 1]} : vector<8x256xf32> to vector<8x32xf32>
    %9 = arith.truncf %8 : vector<8x32xf32> to vector<8x32xbf16>
    %c0_5 = arith.constant 0 : index
    %c0_6 = arith.constant 0 : index
    %c0_7 = arith.constant 0 : index
    %10 = vector.load %arg5[%c0_5, %c0_6, %c0_7] : memref<2x8x32xbf16, #tpu.memory_space<vmem>>, vector<1x8x32xbf16>
    %11 = vector.shape_cast %10 : vector<1x8x32xbf16> to vector<8x32xbf16>
    %12 = vector.shape_cast %9 : vector<8x32xbf16> to vector<1x8x32xbf16>
    tpu.vector_store %arg5[%c0_5, %c0_6, %c0_7], %12 {strides = array<i32>} : memref<2x8x32xbf16, #tpu.memory_space<vmem>>, vector<1x8x32xbf16>,
    %13 = vector.extract_strided_slice %7 {offsets = [0, 64], sizes = [8, 32], strides = [1, 1]} : vector<8x256xf32> to vector<8x32xf32>
    %14 = arith.truncf %13 : vector<8x32xf32> to vector<8x32xbf16>
    %c0_8 = arith.constant 0 : index
    %c0_9 = arith.constant 0 : index
    %c0_10 = arith.constant 0 : index
    %15 = vector.load %arg6[%c0_8, %c0_9, %c0_10] : memref<2x8x32xbf16, #tpu.memory_space<vmem>>, vector<1x8x32xbf16>
    %16 = vector.shape_cast %15 : vector<1x8x32xbf16> to vector<8x32xbf16>
    %17 = vector.shape_cast %14 : vector<8x32xbf16> to vector<1x8x32xbf16>
    tpu.vector_store %arg6[%c0_8, %c0_9, %c0_10], %17 {strides = array<i32>} : memref<2x8x32xbf16, #tpu.memory_space<vmem>>, vector<1x8x32xbf16>,
    %18 = vector.extract_strided_slice %7 {offsets = [0, 128], sizes = [8, 32], strides = [1, 1]} : vector<8x256xf32> to vector<8x32xf32>
    %c0_11 = arith.constant 0 : index
    %c0_12 = arith.constant 0 : index
    %c0_13 = arith.constant 0 : index
    %19 = vector.load %arg4[%c0_11, %c0_12, %c0_13] : memref<2x8x32xf32, #tpu.memory_space<vmem>>, vector<1x8x32xf32>
    %20 = vector.shape_cast %19 : vector<1x8x32xf32> to vector<8x32xf32>
    %21 = vector.shape_cast %18 : vector<8x32xf32> to vector<1x8x32xf32>
    tpu.vector_store %arg4[%c0_11, %c0_12, %c0_13], %21 {strides = array<i32>} : memref<2x8x32xf32, #tpu.memory_space<vmem>>, vector<1x8x32xf32>,
    %22 = vector.extract_strided_slice %7 {offsets = [0, 32], sizes = [8, 32], strides = [1, 1]} : vector<8x256xf32> to vector<8x32xf32>
    %23 = arith.truncf %22 : vector<8x32xf32> to vector<8x32xbf16>
    %c1 = arith.constant 1 : index
    %c0_14 = arith.constant 0 : index
    %c0_15 = arith.constant 0 : index
    %24 = vector.load %arg5[%c1, %c0_14, %c0_15] : memref<2x8x32xbf16, #tpu.memory_space<vmem>>, vector<1x8x32xbf16>
    %25 = vector.shape_cast %24 : vector<1x8x32xbf16> to vector<8x32xbf16>
    %26 = vector.shape_cast %23 : vector<8x32xbf16> to vector<1x8x32xbf16>
    tpu.vector_store %arg5[%c1, %c0_14, %c0_15], %26 {strides = array<i32>} : memref<2x8x32xbf16, #tpu.memory_space<vmem>>, vector<1x8x32xbf16>,
    %27 = vector.extract_strided_slice %7 {offsets = [0, 96], sizes = [8, 32], strides = [1, 1]} : vector<8x256xf32> to vector<8x32xf32>
    %28 = arith.truncf %27 : vector<8x32xf32> to vector<8x32xbf16>
    %c1_16 = arith.constant 1 : index
    %c0_17 = arith.constant 0 : index
    %c0_18 = arith.constant 0 : index
    %29 = vector.load %arg6[%c1_16, %c0_17, %c0_18] : memref<2x8x32xbf16, #tpu.memory_space<vmem>>, vector<1x8x32xbf16>
    %30 = vector.shape_cast %29 : vector<1x8x32xbf16> to vector<8x32xbf16>
    %31 = vector.shape_cast %28 : vector<8x32xbf16> to vector<1x8x32xbf16>
    tpu.vector_store %arg6[%c1_16, %c0_17, %c0_18], %31 {strides = array<i32>} : memref<2x8x32xbf16, #tpu.memory_space<vmem>>, vector<1x8x32xbf16>,
    %32 = vector.extract_strided_slice %7 {offsets = [0, 160], sizes = [8, 32], strides = [1, 1]} : vector<8x256xf32> to vector<8x32xf32>
    %c1_19 = arith.constant 1 : index
    %c0_20 = arith.constant 0 : index
    %c0_21 = arith.constant 0 : index
    %33 = vector.load %arg4[%c1_19, %c0_20, %c0_21] : memref<2x8x32xf32, #tpu.memory_space<vmem>>, vector<1x8x32xf32>
    %34 = vector.shape_cast %33 : vector<1x8x32xf32> to vector<8x32xf32>
    %35 = vector.shape_cast %32 : vector<8x32xf32> to vector<1x8x32xf32>
    tpu.vector_store %arg4[%c1_19, %c0_20, %c0_21], %35 {strides = array<i32>} : memref<2x8x32xf32, #tpu.memory_space<vmem>>, vector<1x8x32xf32>,
    %36 = vector.extract_strided_slice %7 {offsets = [0, 192], sizes = [8, 64], strides = [1, 1]} : vector<8x256xf32> to vector<8x64xf32>
    %c0_22 = arith.constant 0 : index
    %c0_23 = arith.constant 0 : index
    %37 = vector.load %arg7[%c0_22, %c0_23] : memref<8x64xf32, #tpu.memory_space<vmem>>, vector<8x64xf32>
    tpu.vector_store %arg7[%c0_22, %c0_23], %36 {strides = array<i32>} : memref<8x64xf32, #tpu.memory_space<vmem>>, vector<8x64xf32>,
    return
  }
  func.func @transform_0(%arg0: i32) -> (i32, i32) {
    %c0_i32 = arith.constant 0 : i32
    %c0_i32_0 = arith.constant 0 : i32
    return %arg0, %c0_i32 : i32, i32
  }
  func.func @transform_1(%arg0: i32) -> (i32, i32) {
    %c0_i32 = arith.constant 0 : i32
    %c0_i32_0 = arith.constant 0 : i32
    %c0_i32_1 = arith.constant 0 : i32
    return %c0_i32, %c0_i32_0 : i32, i32
  }
  func.func @transform_2(%arg0: i32) -> (i32, i32) {
    %c0_i32 = arith.constant 0 : i32
    %c0_i32_0 = arith.constant 0 : i32
    %c0_i32_1 = arith.constant 0 : i32
    return %c0_i32, %c0_i32_0 : i32, i32
  }
  func.func @transform_3(%arg0: i32) -> (i32, i32, i32) {
    %c0_i32 = arith.constant 0 : i32
    %c0_i32_0 = arith.constant 0 : i32
    %c0_i32_1 = arith.constant 0 : i32
    return %c0_i32, %arg0, %c0_i32_0 : i32, i32, i32
  }
  func.func @transform_4(%arg0: i32) -> (i32, i32, i32) {
    %c0_i32 = arith.constant 0 : i32
    %c0_i32_0 = arith.constant 0 : i32
    %c0_i32_1 = arith.constant 0 : i32
    return %c0_i32, %arg0, %c0_i32_0 : i32, i32, i32
  }
  func.func @transform_5(%arg0: i32) -> (i32, i32, i32) {
    %c0_i32 = arith.constant 0 : i32
    %c0_i32_0 = arith.constant 0 : i32
    %c0_i32_1 = arith.constant 0 : i32
    return %c0_i32, %arg0, %c0_i32_0 : i32, i32, i32
  }
  func.func @transform_6(%arg0: i32) -> (i32, i32) {
    %c0_i32 = arith.constant 0 : i32
    %c0_i32_0 = arith.constant 0 : i32
    return %arg0, %c0_i32 : i32, i32
  }
}

</mosaic_0001>

<llo_original>
// kernel: tpu_custom_call.1
$region0: #{tpu_custom_call.1}
  #allocation0 [shape = 'u32[]', space=smem, size = 0x4, offset = 0x4, fixed_abs, tag = 'smem constant byte address 0x4 - core index']
  #allocation1 [shape = 'u32[72,128]{1,0:T(1,128)}', space=vmem, size = 0x9000, scoped, tag = 'internal scratch']
  %s0 = inlined_call_operand.vmem [shape: f32[8,4], index: 0, kind: input, shape index: {}]
  %s1 = inlined_call_operand.vmem [shape: f32[4,256], index: 1, kind: input, shape index: {}]
  %s2 = inlined_call_operand.vmem [shape: f32[1,256], index: 2, kind: input, shape index: {}]
  %s3 = inlined_call_operand.hbm [shape: f32[2,8,32], index: 3, kind: output, shape index: {0}]
  %s4 = inlined_call_operand.hbm [shape: bf16[2,8,32], index: 4, kind: output, shape index: {1}]
  %s5 = inlined_call_operand.hbm [shape: bf16[2,8,32], index: 5, kind: output, shape index: {2}]
  %s6 = inlined_call_operand.hbm [shape: f32[8,64], index: 6, kind: output, shape index: {3}]
  %7 = xla_tuple %s3, %s4, %s5, %s6
  %s8 = sld [smem:[#allocation0]]
  $region46: #{tpu_custom_call.1} parent=0
    _
  %s10 = ssub.s32 1, %s8
  %s11 = scalar_select 0, %s10, %s8
  $region1: #{tpu_custom_call.1} parent=0
    #allocation2 [shape = 'u8[8192]{0}', space=vmem, size = 0x2000, scoped, tag = 'output window, operand 0, single buffered']
    #allocation3 [shape = 's32[1]{0}', space=sflag, size = 0x4, scoped, tag = 'scoped memory for tpu_custom_call.1']
    #allocation4 [shape = 'u8[4096]{0}', space=vmem, size = 0x1000, scoped, tag = 'output window, operand 1, single buffered']
    #allocation5 [shape = 's32[1]{0}', space=sflag, size = 0x4, scoped, tag = 'scoped memory for tpu_custom_call.1']
    #allocation6 [shape = 'u8[4096]{0}', space=vmem, size = 0x1000, scoped, tag = 'output window, operand 2, single buffered']
    #allocation7 [shape = 'u8[4096]{0}', space=vmem, size = 0x1000, scoped, tag = 'output window, operand 3, single buffered']
    #allocation8 [shape = 's32[1]{0}', space=sflag, size = 0x4, scoped, tag = 'scoped memory for tpu_custom_call.1']
    %12 = vsyncpa [#allocation3], 0
    %13 = vsyncpa [#allocation5], 0
    %14 = vsyncpa [#allocation8], 0
    // Predicated region
    $region2: #{tpu_custom_call.1} parent=1 // pred_check
      _
    $region3: #{tpu_custom_call.1} parent=1 // pred_check_branch
      %16 = sbr.rel (0) target = $region5
    $region4: #{tpu_custom_call.1} parent=1 // pred_region
      _
    $region5: #{tpu_custom_call.1} parent=1 // pred_fallthru
      _
    // Predicated region
    $region6: #{tpu_custom_call.1} parent=1 // pred_check
      _
    $region7: #{tpu_custom_call.1} parent=1 // pred_check_branch
      %18 = sbr.rel (0) target = $region9
    $region8: #{tpu_custom_call.1} parent=1 // pred_region
      _
    $region9: #{tpu_custom_call.1} parent=1 // pred_fallthru
      _
    // Predicated region
    $region10: #{tpu_custom_call.1} parent=1 // pred_check
      _
    $region11: #{tpu_custom_call.1} parent=1 // pred_check_branch
      %20 = sbr.rel (0) target = $region13
    $region12: #{tpu_custom_call.1} parent=1 // pred_region
      _
    $region13: #{tpu_custom_call.1} parent=1 // pred_fallthru
      _
    %v22 = vld [vmem:[%s0] sm:$0xff]
    %v23 = vpack.c.bf16 %v22, %v22
    %v24 = vld [vmem:[%s1] sm:$0xff]
    %26 = vst [vmem:[#allocation1] ss:$2 sm:$0xff] %v24
    %v27 = vld.sshfl [vmem:[#allocation1] sm:$0xff pattern:$0x75316420]
    %v28 = vld.sshfl [vmem:[#allocation1 + $0x8] sm:$0xff pattern:$0x75316420]
    %v31 = vpack.c.bf16 %v27, %v27
    %v32 = vpack.c.bf16 %v28, %v28
    %v33 = vld [vmem:[%s2] sm:$0x3]
    %v35 = vperm.slane %v33, 0
    %v36 = vperm.slane %v33, 1
    %vm39 = vcmask 31744
    %v41 = vsel %vm39, %v23, 0
    %vm43 = vcmask 1041408
    %v45 = vsel %vm43, %v31, 0
    %v48 = vsel %vm43, %v32, 0
    %50 = vmatpush.bf16.msra.mxu0 0
    %51 = vmatpush.bf16.msra.mxu0 0
    %52 = vmatpush.bf16.msra.mxu0 0
    %53 = vmatpush.bf16.msra.mxu0 0
    %54 = vmatpush.bf16.msra.mxu0 0
    %55 = vmatpush.bf16.msra.mxu0 0
    %56 = vmatpush.bf16.msra.mxu0 0
    %57 = vmatpush.bf16.msra.mxu0 %v45
    %58 = vmatmul.bf16.gmra.mxu0 %v41
    %v59 = vpop.f32.mrf.mxu0
    %v60 = vadd.f32 %v35, %v59
    %v61 = vpop.f32.mrf.mxu0
    %62 = vdwg.mxu0
    %63 = vmatpush.bf16.msra.mxu0 0
    %64 = vmatpush.bf16.msra.mxu0 0
    %65 = vmatpush.bf16.msra.mxu0 0
    %66 = vmatpush.bf16.msra.mxu0 0
    %67 = vmatpush.bf16.msra.mxu0 0
    %68 = vmatpush.bf16.msra.mxu0 0
    %69 = vmatpush.bf16.msra.mxu0 0
    %70 = vmatpush.bf16.msra.mxu0 %v48
    %71 = vmatmul.bf16.gmra.mxu0 %v41
    %v72 = vpop.f32.mrf.mxu0
    %v73 = vadd.f32 %v36, %v72
    %v74 = vpop.f32.mrf.mxu0
    %75 = vdwg.mxu0
    %v76 = vpack.c.bf16 %v60, %v60
    %vm77 = vcmask 257024
    %78 = vst.msk [vmem:[#allocation4] sm:$0xf] %vm77, %v76
    %80 = vrot.lane.b32.xlu0 %v76, 64
    %v81 = vpop.permute.xlu0 %80
    %83 = vst.msk [vmem:[#allocation6] sm:$0xf] %vm77, %v81
    %vm84 = vcmask 261120
    %85 = vst.msk [vmem:[#allocation2] sm:$0xff] %vm84, %v73
    %86 = vrot.lane.b32.xlu0 %v76, 96
    %v87 = vpop.permute.xlu0 %86
    %s89 = scalar_lea.vmem [#allocation4], 4
    %90 = vst.msk [vmem:[%s89] sm:$0xf] %vm77, %v87
    %91 = vrot.lane.b32.xlu0 %v76, 32
    %v92 = vpop.permute.xlu0 %91
    %s94 = scalar_lea.vmem [#allocation6], 4
    %95 = vst.msk [vmem:[%s94] sm:$0xf] %vm77, %v92
    %97 = vrot.lane.b32.xlu0 %v73, 96
    %v98 = vpop.permute.xlu0 %97
    %s100 = scalar_lea.vmem [#allocation2], 8
    %101 = vst.msk [vmem:[%s100] sm:$0xff] %vm84, %v98
    %102 = vrot.lane.b32.xlu0 %v73, 64
    %v103 = vpop.permute.xlu0 %102
    %vm105 = vcmask 523264
    %106 = vst.msk [vmem:[#allocation7] sm:$0xff] %vm105, %v103
    // Predicated region
    $region14: #{tpu_custom_call.1} parent=1 // pred_check
      _
    $region15: #{tpu_custom_call.1} parent=1 // pred_check_branch
      %108 = sbr.rel (0) target = $region17
    $region16: #{tpu_custom_call.1} parent=1 // pred_region
      %110 = vsyncadd [#allocation3], 0
      %s111 = sshll.u32 [#allocation2], 4
      %s112 = int_to_ptr.vmem [resolvable:$true] %s111
      %s113 = sshll.u32 %s3, 4
      %s114 = int_to_ptr.hbm [resolvable:$true] %s113
      %119 = dma.vmem_to_hbm [thread:$0]  %s112, 256, %s114, [#allocation3], 128, 128, 8
    $region17: #{tpu_custom_call.1} parent=1 // pred_fallthru
      _
    // Predicated region
    $region18: #{tpu_custom_call.1} parent=1 // pred_check
      _
    $region19: #{tpu_custom_call.1} parent=1 // pred_check_branch
      %121 = sbr.rel (0) target = $region21
    $region20: #{tpu_custom_call.1} parent=1 // pred_region
      %123 = vsyncadd [#allocation5], 0
      %s124 = sshll.u32 [#allocation4], 4
      %s125 = int_to_ptr.vmem [resolvable:$true] %s124
      %s126 = sshll.u32 %s4, 4
      %s127 = int_to_ptr.hbm [resolvable:$true] %s126
      %132 = dma.vmem_to_hbm [thread:$0]  %s125, 128, %s127, [#allocation5], 64, 64, 4
    $region21: #{tpu_custom_call.1} parent=1 // pred_fallthru
      _
    // Predicated region
    $region22: #{tpu_custom_call.1} parent=1 // pred_check
      _
    $region23: #{tpu_custom_call.1} parent=1 // pred_check_branch
      %134 = sbr.rel (0) target = $region25
    $region24: #{tpu_custom_call.1} parent=1 // pred_region
      %136 = vsyncadd [#allocation5], 0
      %s137 = sshll.u32 [#allocation6], 4
      %s138 = int_to_ptr.vmem [resolvable:$true] %s137
      %s139 = sshll.u32 %s5, 4
      %s140 = int_to_ptr.hbm [resolvable:$true] %s139
      %145 = dma.vmem_to_hbm [thread:$0]  %s138, 128, %s140, [#allocation5], 64, 64, 4
    $region25: #{tpu_custom_call.1} parent=1 // pred_fallthru
      _
    // Predicated region
    $region26: #{tpu_custom_call.1} parent=1 // pred_check
      _
    $region27: #{tpu_custom_call.1} parent=1 // pred_check_branch
      %147 = sbr.rel (0) target = $region29
    $region28: #{tpu_custom_call.1} parent=1 // pred_region
      %149 = vsyncadd [#allocation8], 0
      %s151 = sshll.u32 [#allocation7], 4
      %s152 = int_to_ptr.vmem [resolvable:$true] %s151
      %s153 = sshll.u32 %s6, 4
      %s154 = int_to_ptr.hbm [resolvable:$true] %s153
      %156 = dma.vmem_to_hbm [thread:$0]  %s152, 128, %s154, [#allocation8]
    $region29: #{tpu_custom_call.1} parent=1 // pred_fallthru
      _
    // Predicated region
    $region30: #{tpu_custom_call.1} parent=1 // pred_check
      _
    $region31: #{tpu_custom_call.1} parent=1 // pred_check_branch
      %158 = sbr.rel (0) target = $region33
    $region32: #{tpu_custom_call.1} parent=1 // pred_region
      %160 = dma.done [#allocation3], 256
    $region33: #{tpu_custom_call.1} parent=1 // pred_fallthru
      _
    // Predicated region
    $region34: #{tpu_custom_call.1} parent=1 // pred_check
      _
    $region35: #{tpu_custom_call.1} parent=1 // pred_check_branch
      %162 = sbr.rel (0) target = $region37
    $region36: #{tpu_custom_call.1} parent=1 // pred_region
      %164 = dma.done [#allocation5], 128
    $region37: #{tpu_custom_call.1} parent=1 // pred_fallthru
      _
    // Predicated region
    $region38: #{tpu_custom_call.1} parent=1 // pred_check
      _
    $region39: #{tpu_custom_call.1} parent=1 // pred_check_branch
      %166 = sbr.rel (0) target = $region41
    $region40: #{tpu_custom_call.1} parent=1 // pred_region
      %168 = dma.done [#allocation5], 128
    $region41: #{tpu_custom_call.1} parent=1 // pred_fallthru
      _
    // Predicated region
    $region42: #{tpu_custom_call.1} parent=1 // pred_check
      _
    $region43: #{tpu_custom_call.1} parent=1 // pred_check_branch
      %170 = sbr.rel (0) target = $region45
    $region44: #{tpu_custom_call.1} parent=1 // pred_region
      %172 = dma.done [#allocation8], 128
    $region45: #{tpu_custom_call.1} parent=1 // pred_fallthru
      _
    %173 = vsyncpa [#allocation3], 1
    %174 = vsyncpa [#allocation5], 1
    %175 = vsyncpa [#allocation8], 1

</llo_original>
